<compile_context>
chip_gen: v6e
topology: v6e:2x2x1
jax: 0.10.0
libtpu: 0.0.40
codegen_flags: <defaults>
</compile_context>

<pallas_src>
import functools

import jax
import jax.numpy as jnp
from jax import lax
from jax.experimental import pallas as pl
from jax.experimental.pallas import tpu as pltpu


def _round_up(x, m):
    return ((x + m - 1) // m) * m


def _rnn_seq_kernel(x_ref,               # (Bp, Xp)      [category | input_t], padded
                    h0_ref,              # (Bp, Hp)      initial hidden, padded
                    wx_ref,              # (Xp, Hp+Op)   fused i2h|i2o, x rows
                    wh_ref,              # (Hp, Hp+Op)   fused i2h|i2o, hidden rows
                    bf_ref,              # (1,  Hp+Op)   fused bias
                    w_oh_ref,            # (Hp, Op)      o2o rows for hidden'
                    w_oo_ref,            # (Op, Op)      o2o rows for i2o output
                    b_o_ref,             # (1,  Op)      o2o bias
                    out_ref,             # (Bp, Op)      per-step log-softmax output
                    hid_ref,             # (Bp, Hp)      carried hidden (VMEM-resident)
                    *, h_pad, o_valid):
    t = pl.program_id(0)

    # Initialize the carried hidden state from h0 on the first grid step.
    @pl.when(t == 0)
    def _():
        hid_ref[...] = h0_ref[...]

    h_prev = hid_ref[...]
    x = x_ref[...]

    # Fused (i2h | i2o) GEMM in split-weight form (no concat of x and h).
    fused = (jnp.dot(x, wx_ref[...], preferred_element_type=jnp.float32)
             + jnp.dot(h_prev, wh_ref[...], preferred_element_type=jnp.float32)
             + bf_ref[...])
    h_new = fused[:, :h_pad]          # (Bp, Hp)  -- lane-aligned slice
    o = fused[:, h_pad:]              # (Bp, Op)

    # o2o(cat([h_new, o], dim=1)) in split-weight form.
    o2 = (jnp.dot(h_new, w_oh_ref[...], preferred_element_type=jnp.float32)
          + jnp.dot(o, w_oo_ref[...], preferred_element_type=jnp.float32)
          + b_o_ref[...])

    # Mask padded output lanes before the softmax reduction.
    col = lax.broadcasted_iota(jnp.int32, o2.shape, dimension=1)
    o2 = jnp.where(col < o_valid, o2, jnp.float32(-1e30))

    # log_softmax(dim=1)
    m = jnp.max(o2, axis=1, keepdims=True)
    shifted = o2 - m
    lse = jnp.log(jnp.sum(jnp.exp(shifted), axis=1, keepdims=True))

    out_ref[...] = (shifted - lse).astype(out_ref.dtype)
    hid_ref[...] = h_new.astype(hid_ref.dtype)


def prepare_params(params, n_cat, input_size, hidden_size, output_size):
    """One-time weight prep: transpose, split (concat elimination), fuse, pad."""
    X = n_cat + input_size                    # non-recurrent input width
    H, O = hidden_size, output_size
    Xp = _round_up(max(X, 1), 128)
    Hp = _round_up(H, 128)
    Op = _round_up(O, 128)

    w_i2h = params["w_i2h"].T                 # (X+H, H)
    w_i2o = params["w_i2o"].T                 # (X+H, O)
    w_o2o = params["w_o2o"].T                 # (H+O, O)

    # Fused (x -> [hidden' | i2o-out]) weight, zero-padded / lane-aligned.
    wx = jnp.zeros((Xp, Hp + Op), jnp.float32)
    wx = wx.at[:X, :H].set(w_i2h[:X, :])
    wx = wx.at[:X, Hp:Hp + O].set(w_i2o[:X, :])

    # Fused (h_prev -> [hidden' | i2o-out]) weight.
    wh = jnp.zeros((Hp, Hp + Op), jnp.float32)
    wh = wh.at[:H, :H].set(w_i2h[X:, :])
    wh = wh.at[:H, Hp:Hp + O].set(w_i2o[X:, :])

    bf = jnp.zeros((1, Hp + Op), jnp.float32)
    bf = bf.at[0, :H].set(params["b_i2h"])
    bf = bf.at[0, Hp:Hp + O].set(params["b_i2o"])

    # o2o in split-weight form.
    w_oh = jnp.zeros((Hp, Op), jnp.float32).at[:H, :O].set(w_o2o[:H, :])
    w_oo = jnp.zeros((Op, Op), jnp.float32).at[:O, :O].set(w_o2o[H:, :])
    b_o = jnp.zeros((1, Op), jnp.float32).at[0, :O].set(params["b_o2o"])

    weights = dict(wx=wx, wh=wh, bf=bf, w_oh=w_oh, w_oo=w_oo, b_o=b_o)
    dims = (X, Xp, H, Hp, O, Op)
    return weights, dims


def rnn_forward_seq(category, inputs_seq, hidden0, weights, dims):
    """Run the RNN over a whole sequence inside one pallas_call.

    category:   (B, n_cat)     inputs_seq: (T, B, input_size)
    hidden0:    (B, hidden)    -> (log_outputs (T, B, O), final_hidden (B, H))
    """
    X, Xp, H, Hp, O, Op = dims
    T, B, _ = inputs_seq.shape
    n_cat = category.shape[1]
    Bp = _round_up(max(B, 8), 8)

    # (T, Bp, Xp) slab of [category | input_t], zero-padded; category is constant
    # over time so it is folded in once here (outside the time loop).
    x_seq = jnp.zeros((T, Bp, Xp), jnp.float32)
    if n_cat > 0:
        x_seq = x_seq.at[:, :B, :n_cat].set(
            jnp.broadcast_to(category[None], (T, B, n_cat)))
    x_seq = x_seq.at[:, :B, n_cat:X].set(inputs_seq)

    h0 = jnp.zeros((Bp, Hp), jnp.float32).at[:B, :H].set(hidden0)

    kernel = functools.partial(_rnn_seq_kernel, h_pad=Hp, o_valid=O)
    const = lambda t: (0, 0)

    out_seq_p, hid_p = pl.pallas_call(
        kernel,
        out_shape=(jax.ShapeDtypeStruct((T, Bp, Op), jnp.float32),
                   jax.ShapeDtypeStruct((Bp, Hp), jnp.float32)),
        grid=(T,),
        in_specs=[
            pl.BlockSpec((None, Bp, Xp), lambda t: (t, 0, 0)),   # x_t (pipelined)
            pl.BlockSpec((Bp, Hp), const),                       # h0 (resident)
            pl.BlockSpec((Xp, Hp + Op), const),                  # wx (resident)
            pl.BlockSpec((Hp, Hp + Op), const),                  # wh (resident)
            pl.BlockSpec((1, Hp + Op), const),                   # bf (resident)
            pl.BlockSpec((Hp, Op), const),                       # w_oh (resident)
            pl.BlockSpec((Op, Op), const),                       # w_oo (resident)
            pl.BlockSpec((1, Op), const),                        # b_o (resident)
        ],
        out_specs=(
            pl.BlockSpec((None, Bp, Op), lambda t: (t, 0, 0)),   # per-step output
            pl.BlockSpec((Bp, Hp), const),                       # carried hidden
        ),
        compiler_params=pltpu.CompilerParams(
            dimension_semantics=("arbitrary",)),                 # time is sequential
    )(x_seq, h0, weights["wx"], weights["wh"], weights["bf"],
      weights["w_oh"], weights["w_oo"], weights["b_o"])

    return out_seq_p[:, :B, :O], hid_p[:B, :H]


# ---------------------------------------------------------------------------
# Pure-JAX reference (PyTorch-faithful, per-step) for correctness checking.
# ---------------------------------------------------------------------------
def _reference_step(category, x_t, h, params):
    xc = jnp.concatenate([category, x_t, h], axis=1)
    h_new = xc @ params["w_i2h"].T + params["b_i2h"]
    o = xc @ params["w_i2o"].T + params["b_i2o"]
    oc = jnp.concatenate([h_new, o], axis=1)
    o2 = oc @ params["w_o2o"].T + params["b_o2o"]
    return jax.nn.log_softmax(o2, axis=1), h_new


def _reference_seq(category, inputs_seq, hidden0, params):
    def step(h, x_t):
        out, h_new = _reference_step(category, x_t, h, params)
        return h_new, out
    h_final, outs = lax.scan(step, hidden0, inputs_seq)
    return outs, h_final


def init_params(key, n_cat, input_size, hidden_size, output_size):
    """Deterministic init mimicking nn.Linear's U(-1/sqrt(fan_in), 1/sqrt(fan_in))."""
    c = n_cat + input_size + hidden_size
    ks = jax.random.split(key, 6)

    def lin(kw, kb, fan_in, fan_out):
        bound = 1.0 / jnp.sqrt(jnp.float32(fan_in))
        w = jax.random.uniform(kw, (fan_out, fan_in), jnp.float32, -bound, bound)
        b = jax.random.uniform(kb, (fan_out,), jnp.float32, -bound, bound)
        return w, b

    w_i2h, b_i2h = lin(ks[0], ks[1], c, hidden_size)
    w_i2o, b_i2o = lin(ks[2], ks[3], c, output_size)
    w_o2o, b_o2o = lin(ks[4], ks[5], hidden_size + output_size, output_size)
    return dict(w_i2h=w_i2h, b_i2h=b_i2h,
                w_i2o=w_i2o, b_i2o=b_i2o,
                w_o2o=w_o2o, b_o2o=b_o2o)


if __name__ == "__main__":
    B, N_CAT, INPUT_SIZE, HIDDEN_SIZE, OUTPUT_SIZE, T = 2, 4, 16, 32, 16, 8

    key = jax.random.PRNGKey(0)
    k_cat, k_in, k_par = jax.random.split(key, 3)

    category = jax.nn.one_hot(
        jax.random.randint(k_cat, (B,), 0, N_CAT), N_CAT, dtype=jnp.float32)
    inputs_seq = jax.random.normal(k_in, (T, B, INPUT_SIZE), jnp.float32)
    hidden0 = jnp.zeros((B, HIDDEN_SIZE), jnp.float32)     # init_hidden()

    params = init_params(k_par, N_CAT, INPUT_SIZE, HIDDEN_SIZE, OUTPUT_SIZE)

    # One-time weight prep (transpose / split / fuse / pad) hoisted out of the loop.
    weights, dims = prepare_params(params, N_CAT, INPUT_SIZE,
                                   HIDDEN_SIZE, OUTPUT_SIZE)

    fwd = jax.jit(lambda cat, xs, h0: rnn_forward_seq(cat, xs, h0, weights, dims))

    out_seq, final_hidden = fwd(category, inputs_seq, hidden0)
    out_seq = jax.block_until_ready(out_seq)
    final_hidden = jax.block_until_ready(final_hidden)

    ref_out_seq, ref_hidden = _reference_seq(category, inputs_seq, hidden0, params)

    assert out_seq.shape == (T, B, OUTPUT_SIZE)
    assert final_hidden.shape == (B, HIDDEN_SIZE)
    assert bool(jnp.allclose(out_seq, ref_out_seq, atol=1e-3, rtol=1e-3))
    assert bool(jnp.allclose(final_hidden, ref_hidden, atol=1e-3, rtol=1e-3))

    print("KERNEL_OK")
</pallas_src>

<mosaic_0001>
module attributes {stable_mosaic.version = 11 : i64} {
  func.func @_rnn_seq_kernel(%arg0: i32, %arg1: memref<1x8x128xf32, #tpu.memory_space<vmem>>, %arg2: memref<8x128xf32, #tpu.memory_space<vmem>>, %arg3: memref<128x256xf32, #tpu.memory_space<vmem>>, %arg4: memref<128x256xf32, #tpu.memory_space<vmem>>, %arg5: memref<1x256xf32, #tpu.memory_space<vmem>>, %arg6: memref<128x128xf32, #tpu.memory_space<vmem>>, %arg7: memref<128x128xf32, #tpu.memory_space<vmem>>, %arg8: memref<1x128xf32, #tpu.memory_space<vmem>>, %arg9: memref<1x8x128xf32, #tpu.memory_space<vmem>>, %arg10: memref<8x128xf32, #tpu.memory_space<vmem>>) attributes {dimension_semantics = [#tpu.dimension_semantics<arbitrary>], iteration_bounds = array<i64: 8>, scalar_prefetch = 0 : i64, scratch_operands = 0 : i64, tpu.core_type = #tpu.core_type<tc>, window_params = [{transform_indices = @transform_0, window_bounds = array<i64: 1, 8, 128>}, {pipeline_mode = #tpu.pipeline_mode<synchronous>, transform_indices = @transform_1, window_bounds = array<i64: 8, 128>}, {pipeline_mode = #tpu.pipeline_mode<synchronous>, transform_indices = @transform_2, window_bounds = array<i64: 128, 256>}, {pipeline_mode = #tpu.pipeline_mode<synchronous>, transform_indices = @transform_3, window_bounds = array<i64: 128, 256>}, {pipeline_mode = #tpu.pipeline_mode<synchronous>, transform_indices = @transform_4, window_bounds = array<i64: 1, 256>}, {pipeline_mode = #tpu.pipeline_mode<synchronous>, transform_indices = @transform_5, window_bounds = array<i64: 128, 128>}, {pipeline_mode = #tpu.pipeline_mode<synchronous>, transform_indices = @transform_6, window_bounds = array<i64: 128, 128>}, {pipeline_mode = #tpu.pipeline_mode<synchronous>, transform_indices = @transform_7, window_bounds = array<i64: 1, 128>}, {transform_indices = @transform_8, window_bounds = array<i64: 1, 8, 128>}, {pipeline_mode = #tpu.pipeline_mode<synchronous>, transform_indices = @transform_9, window_bounds = array<i64: 8, 128>}]} {
    %c0_i32 = arith.constant 0 : i32
    %0 = arith.cmpi eq, %arg0, %c0_i32 : i32
    %1 = arith.extui %0 : i1 to i32
    %c0_i32_0 = arith.constant 0 : i32
    %2 = arith.cmpi ne, %1, %c0_i32_0 : i32
    scf.if %2 {
      %c0_28 = arith.constant 0 : index
      %c0_29 = arith.constant 0 : index
      %43 = vector.load %arg2[%c0_28, %c0_29] : memref<8x128xf32, #tpu.memory_space<vmem>>, vector<8x128xf32>
      %c0_30 = arith.constant 0 : index
      %c0_31 = arith.constant 0 : index
      %44 = vector.load %arg10[%c0_30, %c0_31] : memref<8x128xf32, #tpu.memory_space<vmem>>, vector<8x128xf32>
      tpu.vector_store %arg10[%c0_30, %c0_31], %43 {strides = array<i32>} : memref<8x128xf32, #tpu.memory_space<vmem>>, vector<8x128xf32>,
    } else {
    }
    %c0 = arith.constant 0 : index
    %c0_1 = arith.constant 0 : index
    %3 = vector.load %arg10[%c0, %c0_1] : memref<8x128xf32, #tpu.memory_space<vmem>>, vector<8x128xf32>
    %c0_2 = arith.constant 0 : index
    %c0_3 = arith.constant 0 : index
    %c0_4 = arith.constant 0 : index
    %4 = vector.load %arg1[%c0_2, %c0_3, %c0_4] : memref<1x8x128xf32, #tpu.memory_space<vmem>>, vector<1x8x128xf32>
    %5 = vector.shape_cast %4 : vector<1x8x128xf32> to vector<8x128xf32>
    %c0_5 = arith.constant 0 : index
    %c0_6 = arith.constant 0 : index
    %6 = vector.load %arg3[%c0_5, %c0_6] : memref<128x256xf32, #tpu.memory_space<vmem>>, vector<128x256xf32>
    %cst = arith.constant dense<0.000000e+00> : vector<8x256xf32>
    %7 = tpu.matmul %5, %6, %cst {dimension_numbers = #tpu.dot_dimension_numbers<[1], [0], [0], [1], [0, 0, 1, 1], [], []>} : vector<8x128xf32>, vector<128x256xf32>, vector<8x256xf32> -> vector<8x256xf32>
    %c0_7 = arith.constant 0 : index
    %c0_8 = arith.constant 0 : index
    %8 = vector.load %arg4[%c0_7, %c0_8] : memref<128x256xf32, #tpu.memory_space<vmem>>, vector<128x256xf32>
    %cst_9 = arith.constant dense<0.000000e+00> : vector<8x256xf32>
    %9 = tpu.matmul %3, %8, %cst_9 {dimension_numbers = #tpu.dot_dimension_numbers<[1], [0], [0], [1], [0, 0, 1, 1], [], []>} : vector<8x128xf32>, vector<128x256xf32>, vector<8x256xf32> -> vector<8x256xf32>
    %10 = arith.addf %7, %9 : vector<8x256xf32>
    %c0_10 = arith.constant 0 : index
    %c0_11 = arith.constant 0 : index
    %11 = vector.load %arg5[%c0_10, %c0_11] : memref<1x256xf32, #tpu.memory_space<vmem>>, vector<1x256xf32>
    %12 = vector.broadcast %11 : vector<1x256xf32> to vector<8x256xf32>
    %13 = arith.addf %10, %12 : vector<8x256xf32>
    %14 = vector.extract_strided_slice %13 {offsets = [0, 0], sizes = [8, 128], strides = [1, 1]} : vector<8x256xf32> to vector<8x128xf32>
    %15 = vector.extract_strided_slice %13 {offsets = [0, 128], sizes = [8, 128], strides = [1, 1]} : vector<8x256xf32> to vector<8x128xf32>
    %c0_12 = arith.constant 0 : index
    %c0_13 = arith.constant 0 : index
    %16 = vector.load %arg6[%c0_12, %c0_13] : memref<128x128xf32, #tpu.memory_space<vmem>>, vector<128x128xf32>
    %cst_14 = arith.constant dense<0.000000e+00> : vector<8x128xf32>
    %17 = tpu.matmul %14, %16, %cst_14 {dimension_numbers = #tpu.dot_dimension_numbers<[1], [0], [0], [1], [0, 0, 1, 1], [], []>} : vector<8x128xf32>, vector<128x128xf32>, vector<8x128xf32> -> vector<8x128xf32>
    %c0_15 = arith.constant 0 : index
    %c0_16 = arith.constant 0 : index
    %18 = vector.load %arg7[%c0_15, %c0_16] : memref<128x128xf32, #tpu.memory_space<vmem>>, vector<128x128xf32>
    %cst_17 = arith.constant dense<0.000000e+00> : vector<8x128xf32>
    %19 = tpu.matmul %15, %18, %cst_17 {dimension_numbers = #tpu.dot_dimension_numbers<[1], [0], [0], [1], [0, 0, 1, 1], [], []>} : vector<8x128xf32>, vector<128x128xf32>, vector<8x128xf32> -> vector<8x128xf32>
    %20 = arith.addf %17, %19 : vector<8x128xf32>
    %c0_18 = arith.constant 0 : index
    %c0_19 = arith.constant 0 : index
    %21 = vector.load %arg8[%c0_18, %c0_19] : memref<1x128xf32, #tpu.memory_space<vmem>>, vector<1x128xf32>
    %22 = vector.broadcast %21 : vector<1x128xf32> to vector<8x128xf32>
    %23 = arith.addf %20, %22 : vector<8x128xf32>
    %24 = tpu.iota {dimensions = array<i32: 1>} : vector<8x128xi32>
    %c16_i32 = arith.constant 16 : i32
    %25 = vector.broadcast %c16_i32 : i32 to vector<8x128xi32>
    %26 = arith.cmpi slt, %24, %25 : vector<8x128xi32>
    %cst_20 = arith.constant -1.000000e+30 : f32
    %27 = vector.broadcast %cst_20 : f32 to vector<8x128xf32>
    %28 = arith.select %26, %23, %27 : vector<8x128xi1>, vector<8x128xf32>
    %cst_21 = arith.constant dense<0xFF800000> : vector<8xf32>
    %29 = vector.multi_reduction <maximumf>, %28, %cst_21 [1] : vector<8x128xf32> to vector<8xf32>
    %30 = vector.shape_cast %29 : vector<8xf32> to vector<8x1xf32>
    %31 = vector.broadcast %30 : vector<8x1xf32> to vector<8x128xf32>
    %32 = arith.subf %28, %31 : vector<8x128xf32>
    %33 = math.exp %32 : vector<8x128xf32>
    %cst_22 = arith.constant dense<0.000000e+00> : vector<8xf32>
    %34 = vector.multi_reduction <add>, %33, %cst_22 [1] : vector<8x128xf32> to vector<8xf32>
    %35 = vector.shape_cast %34 : vector<8xf32> to vector<8x1xf32>
    %36 = math.log %35 : vector<8x1xf32>
    %37 = vector.broadcast %36 : vector<8x1xf32> to vector<8x128xf32>
    %38 = arith.subf %32, %37 : vector<8x128xf32>
    %c0_23 = arith.constant 0 : index
    %c0_24 = arith.constant 0 : index
    %c0_25 = arith.constant 0 : index
    %39 = vector.load %arg9[%c0_23, %c0_24, %c0_25] : memref<1x8x128xf32, #tpu.memory_space<vmem>>, vector<1x8x128xf32>
    %40 = vector.shape_cast %39 : vector<1x8x128xf32> to vector<8x128xf32>
    %41 = vector.shape_cast %38 : vector<8x128xf32> to vector<1x8x128xf32>
    tpu.vector_store %arg9[%c0_23, %c0_24, %c0_25], %41 {strides = array<i32>} : memref<1x8x128xf32, #tpu.memory_space<vmem>>, vector<1x8x128xf32>,
    %c0_26 = arith.constant 0 : index
    %c0_27 = arith.constant 0 : index
    %42 = vector.load %arg10[%c0_26, %c0_27] : memref<8x128xf32, #tpu.memory_space<vmem>>, vector<8x128xf32>
    tpu.vector_store %arg10[%c0_26, %c0_27], %14 {strides = array<i32>} : memref<8x128xf32, #tpu.memory_space<vmem>>, vector<8x128xf32>,
    return
  }
  func.func @transform_0(%arg0: i32) -> (i32, i32, i32) {
    %c0_i32 = arith.constant 0 : i32
    %c0_i32_0 = arith.constant 0 : i32
    %c0_i32_1 = arith.constant 0 : i32
    return %arg0, %c0_i32, %c0_i32_0 : i32, i32, i32
  }
  func.func @transform_1(%arg0: i32) -> (i32, i32) {
    %c0_i32 = arith.constant 0 : i32
    %c0_i32_0 = arith.constant 0 : i32
    %c0_i32_1 = arith.constant 0 : i32
    return %c0_i32, %c0_i32_0 : i32, i32
  }
  func.func @transform_2(%arg0: i32) -> (i32, i32) {
    %c0_i32 = arith.constant 0 : i32
    %c0_i32_0 = arith.constant 0 : i32
    %c0_i32_1 = arith.constant 0 : i32
    return %c0_i32, %c0_i32_0 : i32, i32
  }
  func.func @transform_3(%arg0: i32) -> (i32, i32) {
    %c0_i32 = arith.constant 0 : i32
    %c0_i32_0 = arith.constant 0 : i32
    %c0_i32_1 = arith.constant 0 : i32
    return %c0_i32, %c0_i32_0 : i32, i32
  }
  func.func @transform_4(%arg0: i32) -> (i32, i32) {
    %c0_i32 = arith.constant 0 : i32
    %c0_i32_0 = arith.constant 0 : i32
    %c0_i32_1 = arith.constant 0 : i32
    return %c0_i32, %c0_i32_0 : i32, i32
  }
  func.func @transform_5(%arg0: i32) -> (i32, i32) {
    %c0_i32 = arith.constant 0 : i32
    %c0_i32_0 = arith.constant 0 : i32
    %c0_i32_1 = arith.constant 0 : i32
    return %c0_i32, %c0_i32_0 : i32, i32
  }
  func.func @transform_6(%arg0: i32) -> (i32, i32) {
    %c0_i32 = arith.constant 0 : i32
    %c0_i32_0 = arith.constant 0 : i32
    %c0_i32_1 = arith.constant 0 : i32
    return %c0_i32, %c0_i32_0 : i32, i32
  }
  func.func @transform_7(%arg0: i32) -> (i32, i32) {
    %c0_i32 = arith.constant 0 : i32
    %c0_i32_0 = arith.constant 0 : i32
    %c0_i32_1 = arith.constant 0 : i32
    return %c0_i32, %c0_i32_0 : i32, i32
  }
  func.func @transform_8(%arg0: i32) -> (i32, i32, i32) {
    %c0_i32 = arith.constant 0 : i32
    %c0_i32_0 = arith.constant 0 : i32
    %c0_i32_1 = arith.constant 0 : i32
    return %arg0, %c0_i32, %c0_i32_0 : i32, i32, i32
  }
  func.func @transform_9(%arg0: i32) -> (i32, i32) {
    %c0_i32 = arith.constant 0 : i32
    %c0_i32_0 = arith.constant 0 : i32
    %c0_i32_1 = arith.constant 0 : i32
    return %c0_i32, %c0_i32_0 : i32, i32
  }
}

</mosaic_0001>

<llo_original>
// kernel: _lambda_.1
$region0: #{_lambda_.1}
  #allocation0 [shape = 'u32[]', space=smem, size = 0x4, offset = 0x4, fixed_abs, tag = 'smem constant byte address 0x4 - core index']
  #allocation1 [shape = 'u32[144,128]{1,0:T(1,128)}', space=vmem, size = 0x12000, scoped, tag = 'internal scratch']
  %s0 = inlined_call_operand.vmem [shape: f32[8,8,128], index: 0, kind: input, shape index: {}]
  %s1 = inlined_call_operand.vmem [shape: f32[8,128], index: 1, kind: input, shape index: {}]
  %s2 = inlined_call_operand.hbm [shape: f32[128,256], index: 2, kind: input, shape index: {}]
  %s3 = inlined_call_operand.hbm [shape: f32[128,256], index: 3, kind: input, shape index: {}]
  %s4 = inlined_call_operand.vmem [shape: f32[1,256], index: 4, kind: input, shape index: {}]
  %s5 = inlined_call_operand.vmem [shape: f32[128,128], index: 5, kind: input, shape index: {}]
  %s6 = inlined_call_operand.hbm [shape: f32[128,128], index: 6, kind: input, shape index: {}]
  %s7 = inlined_call_operand.vmem [shape: f32[1,128], index: 7, kind: input, shape index: {}]
  %s8 = inlined_call_operand.vmem [shape: f32[8,8,128], index: 8, kind: output, shape index: {0}]
  %s9 = inlined_call_operand.vmem [shape: f32[8,128], index: 9, kind: output, shape index: {1}]
  %10 = xla_tuple %s8, %s9
  %s11 = sld [smem:[#allocation0]]
  $region89: #{_lambda_.1} parent=0
    _
  %s13 = ssub.s32 1, %s11
  %s14 = scalar_select 0, %s13, %s11
  $region1: #{_lambda_.1} parent=0
    #allocation2 [shape = 'u8[131072]{0}', space=vmem, size = 0x20000, scoped, tag = 'input window, operand 2, single buffered']
    #allocation3 [shape = 's32[2]{0}', space=sflag, size = 0x8, scoped, tag = 'scoped memory for _lambda_.1']
    #allocation4 [shape = 'u8[131072]{0}', space=vmem, size = 0x20000, scoped, tag = 'input window, operand 3, single buffered']
    #allocation5 [shape = 's32[1]{0}', space=sflag, size = 0x4, scoped, tag = 'scoped memory for _lambda_.1']
    #allocation6 [shape = 'u8[65536]{0}', space=vmem, size = 0x10000, scoped, tag = 'input window, operand 6, single buffered']
    %15 = vsyncpa [#allocation3], 0
    %16 = vsyncpa [#allocation5], 0
    loop: start=0, step=1, limit=10
    $region2: #{_lambda_.1} parent=1 // loop_pre_header
      _
    $region3: #{_lambda_.1} parent=1 // loop_header
      %s18 = sphi 0, %s22
      %p19 = scmp.ge.s32.totalorder %s18, 10
      %s28 = sphi 0, %s30
      %s31 = sphi 0, %s28
      %s32 = sphi 0, %s31
      %s48 = sphi 0, %s32
      %s52 = sphi 0, %s52
      %s54 = sphi 0, %s52
      %s55 = sphi 0, %s54
      %s69 = sphi 0, %s55
      %s73 = sphi 0, %s73
      %s75 = sphi 0, %s73
      %s76 = sphi 0, %s75
      %s90 = sphi 0, %s76
      %s94 = sphi 0, %s94
      %s96 = sphi 0, %s94
      %s97 = sphi 0, %s96
      %s111 = sphi 0, %s97
      %s115 = sphi 0, %s115
      %s117 = sphi 0, %s115
      %s118 = sphi 0, %s117
      %s132 = sphi 0, %s118
      %s136 = sphi 0, %s136
      %s138 = sphi 0, %s136
      %s139 = sphi 0, %s138
      %s153 = sphi 0, %s139
      %s157 = sphi 0, %s157
      %s159 = sphi 0, %s157
      %s160 = sphi 0, %s159
      %s174 = sphi 0, %s160
      %s178 = sphi 0, %s178
      %s180 = sphi 0, %s178
      %s181 = sphi 0, %s180
      %s195 = sphi 0, %s181
      %s201 = sphi 0, %s203
      %s204 = sphi 0, %s201
      %s205 = sphi 0, %s204
      %s221 = sphi 0, %s205
      %s225 = sphi 0, %s225
      %s227 = sphi 0, %s225
      %s228 = sphi 0, %s227
      %s242 = sphi 0, %s228
    $region4: #{_lambda_.1} parent=1 // loop_header_branch
      %21 = sbr.rel (%p19) target = $region8
    $region5: #{_lambda_.1} parent=1 // loop_body
      %s23 = ssub.s32 %s18, 1
      %s24 = ssub.s32 %s18, 2
      %s25 = sadd.s32 %s18, 1
      %s26 = ssub.s32 %s18, %s25
      %p27 = scmp.eq.s32.totalorder %s26, 0
      %s29 = sadd.s32 %s28, 1
      %s30 = scalar_select %p27, %s28, %s29
      %p33 = pneg %p27
      %p34 = scmp.eq.s32.totalorder %s18, 7
      %p35 = por %p33, %p34
      %p36 = scmp.ne.s32.totalorder %s28, %s31
      %p37 = scmp.eq.s32.totalorder %s18, 0
      %p38 = por %p36, %p37
      %p39 = scmp.ne.s32.totalorder %s28, %s31
      %p40 = scmp.eq.s32.totalorder %s23, 7
      %p41 = por %p39, %p40
      %p42 = scmp.ne.s32.totalorder %s31, %s32
      %p43 = scmp.eq.s32.totalorder %s23, 0
      %p44 = por %p42, %p43
      %p45 = scmp.ne.s32.totalorder %s31, %s32
      %p46 = scmp.eq.s32.totalorder %s24, 7
      %p47 = por %p45, %p46
      %p49 = scmp.ne.s32.totalorder %s32, %s48
      %p50 = scmp.eq.s32.totalorder %s24, 0
      %p51 = por %p49, %p50
      %s53 = sadd.s32 %s52, 1
      %p56 = scmp.eq.s32.totalorder %s18, 7
      %p57 = scmp.ne.s32.totalorder %s52, %s54
      %p58 = scmp.eq.s32.totalorder %s18, 0
      %p59 = por %p57, %p58
      %p60 = scmp.ne.s32.totalorder %s52, %s54
      %p61 = scmp.eq.s32.totalorder %s23, 7
      %p62 = por %p60, %p61
      %p63 = scmp.ne.s32.totalorder %s54, %s55
      %p64 = scmp.eq.s32.totalorder %s23, 0
      %p65 = por %p63, %p64
      %p66 = scmp.ne.s32.totalorder %s54, %s55
      %p67 = scmp.eq.s32.totalorder %s24, 7
      %p68 = por %p66, %p67
      %p70 = scmp.ne.s32.totalorder %s55, %s69
      %p71 = scmp.eq.s32.totalorder %s24, 0
      %p72 = por %p70, %p71
      %s74 = sadd.s32 %s73, 1
      %p77 = scmp.eq.s32.totalorder %s18, 7
      %p78 = scmp.ne.s32.totalorder %s73, %s75
      %p79 = scmp.eq.s32.totalorder %s18, 0
      %p80 = por %p78, %p79
      %p81 = scmp.ne.s32.totalorder %s73, %s75
      %p82 = scmp.eq.s32.totalorder %s23, 7
      %p83 = por %p81, %p82
      %p84 = scmp.ne.s32.totalorder %s75, %s76
      %p85 = scmp.eq.s32.totalorder %s23, 0
      %p86 = por %p84, %p85
      %p87 = scmp.ne.s32.totalorder %s75, %s76
      %p88 = scmp.eq.s32.totalorder %s24, 7
      %p89 = por %p87, %p88
      %p91 = scmp.ne.s32.totalorder %s76, %s90
      %p92 = scmp.eq.s32.totalorder %s24, 0
      %p93 = por %p91, %p92
      %s95 = sadd.s32 %s94, 1
      %p98 = scmp.eq.s32.totalorder %s18, 7
      %p99 = scmp.ne.s32.totalorder %s94, %s96
      %p100 = scmp.eq.s32.totalorder %s18, 0
      %p101 = por %p99, %p100
      %p102 = scmp.ne.s32.totalorder %s94, %s96
      %p103 = scmp.eq.s32.totalorder %s23, 7
      %p104 = por %p102, %p103
      %p105 = scmp.ne.s32.totalorder %s96, %s97
      %p106 = scmp.eq.s32.totalorder %s23, 0
      %p107 = por %p105, %p106
      %p108 = scmp.ne.s32.totalorder %s96, %s97
      %p109 = scmp.eq.s32.totalorder %s24, 7
      %p110 = por %p108, %p109
      %p112 = scmp.ne.s32.totalorder %s97, %s111
      %p113 = scmp.eq.s32.totalorder %s24, 0
      %p114 = por %p112, %p113
      %s116 = sadd.s32 %s115, 1
      %p119 = scmp.eq.s32.totalorder %s18, 7
      %p120 = scmp.ne.s32.totalorder %s115, %s117
      %p121 = scmp.eq.s32.totalorder %s18, 0
      %p122 = por %p120, %p121
      %p123 = scmp.ne.s32.totalorder %s115, %s117
      %p124 = scmp.eq.s32.totalorder %s23, 7
      %p125 = por %p123, %p124
      %p126 = scmp.ne.s32.totalorder %s117, %s118
      %p127 = scmp.eq.s32.totalorder %s23, 0
      %p128 = por %p126, %p127
      %p129 = scmp.ne.s32.totalorder %s117, %s118
      %p130 = scmp.eq.s32.totalorder %s24, 7
      %p131 = por %p129, %p130
      %p133 = scmp.ne.s32.totalorder %s118, %s132
      %p134 = scmp.eq.s32.totalorder %s24, 0
      %p135 = por %p133, %p134
      %s137 = sadd.s32 %s136, 1
      %p140 = scmp.eq.s32.totalorder %s18, 7
      %p141 = scmp.ne.s32.totalorder %s136, %s138
      %p142 = scmp.eq.s32.totalorder %s18, 0
      %p143 = por %p141, %p142
      %p144 = scmp.ne.s32.totalorder %s136, %s138
      %p145 = scmp.eq.s32.totalorder %s23, 7
      %p146 = por %p144, %p145
      %p147 = scmp.ne.s32.totalorder %s138, %s139
      %p148 = scmp.eq.s32.totalorder %s23, 0
      %p149 = por %p147, %p148
      %p150 = scmp.ne.s32.totalorder %s138, %s139
      %p151 = scmp.eq.s32.totalorder %s24, 7
      %p152 = por %p150, %p151
      %p154 = scmp.ne.s32.totalorder %s139, %s153
      %p155 = scmp.eq.s32.totalorder %s24, 0
      %p156 = por %p154, %p155
      %s158 = sadd.s32 %s157, 1
      %p161 = scmp.eq.s32.totalorder %s18, 7
      %p162 = scmp.ne.s32.totalorder %s157, %s159
      %p163 = scmp.eq.s32.totalorder %s18, 0
      %p164 = por %p162, %p163
      %p165 = scmp.ne.s32.totalorder %s157, %s159
      %p166 = scmp.eq.s32.totalorder %s23, 7
      %p167 = por %p165, %p166
      %p168 = scmp.ne.s32.totalorder %s159, %s160
      %p169 = scmp.eq.s32.totalorder %s23, 0
      %p170 = por %p168, %p169
      %p171 = scmp.ne.s32.totalorder %s159, %s160
      %p172 = scmp.eq.s32.totalorder %s24, 7
      %p173 = por %p171, %p172
      %p175 = scmp.ne.s32.totalorder %s160, %s174
      %p176 = scmp.eq.s32.totalorder %s24, 0
      %p177 = por %p175, %p176
      %s179 = sadd.s32 %s178, 1
      %p182 = scmp.eq.s32.totalorder %s18, 7
      %p183 = scmp.ne.s32.totalorder %s178, %s180
      %p184 = scmp.eq.s32.totalorder %s18, 0
      %p185 = por %p183, %p184
      %p186 = scmp.ne.s32.totalorder %s178, %s180
      %p187 = scmp.eq.s32.totalorder %s23, 7
      %p188 = por %p186, %p187
      %p189 = scmp.ne.s32.totalorder %s180, %s181
      %p190 = scmp.eq.s32.totalorder %s23, 0
      %p191 = por %p189, %p190
      %p192 = scmp.ne.s32.totalorder %s180, %s181
      %p193 = scmp.eq.s32.totalorder %s24, 7
      %p194 = por %p192, %p193
      %p196 = scmp.ne.s32.totalorder %s181, %s195
      %p197 = scmp.eq.s32.totalorder %s24, 0
      %p198 = por %p196, %p197
      %s199 = ssub.s32 %s18, %s25
      %p200 = scmp.eq.s32.totalorder %s199, 0
      %s202 = sadd.s32 %s201, 1
      %s203 = scalar_select %p200, %s201, %s202
      %p206 = pneg %p200
      %p207 = scmp.eq.s32.totalorder %s18, 7
      %p208 = por %p206, %p207
      %p209 = scmp.ne.s32.totalorder %s201, %s204
      %p210 = scmp.eq.s32.totalorder %s18, 0
      %p211 = por %p209, %p210
      %p212 = scmp.ne.s32.totalorder %s201, %s204
      %p213 = scmp.eq.s32.totalorder %s23, 7
      %p214 = por %p212, %p213
      %p215 = scmp.ne.s32.totalorder %s204, %s205
      %p216 = scmp.eq.s32.totalorder %s23, 0
      %p217 = por %p215, %p216
      %p218 = scmp.ne.s32.totalorder %s204, %s205
      %p219 = scmp.eq.s32.totalorder %s24, 7
      %p220 = por %p218, %p219
      %p222 = scmp.ne.s32.totalorder %s205, %s221
      %p223 = scmp.eq.s32.totalorder %s24, 0
      %p224 = por %p222, %p223
      %s226 = sadd.s32 %s225, 1
      %p229 = scmp.eq.s32.totalorder %s18, 7
      %p230 = scmp.ne.s32.totalorder %s225, %s227
      %p231 = scmp.eq.s32.totalorder %s18, 0
      %p232 = por %p230, %p231
      %p233 = scmp.ne.s32.totalorder %s225, %s227
      %p234 = scmp.eq.s32.totalorder %s23, 7
      %p235 = por %p233, %p234
      %p236 = scmp.ne.s32.totalorder %s227, %s228
      %p237 = scmp.eq.s32.totalorder %s23, 0
      %p238 = por %p236, %p237
      %p239 = scmp.ne.s32.totalorder %s227, %s228
      %p240 = scmp.eq.s32.totalorder %s24, 7
      %p241 = por %p239, %p240
      %p243 = scmp.ne.s32.totalorder %s228, %s242
      %p244 = scmp.eq.s32.totalorder %s24, 0
      %p245 = por %p243, %p244
      %p246 = scmp.le.s32.totalorder 1, %s18
      %p247 = scmp.lt.s32.totalorder %s18, 9
      %p248 = pnand %p246, %p247
      %p249 = pneg %p248
      // Predicated region
      $region9: #{_lambda_.1} parent=5 // pred_check
        _
      $region10: #{_lambda_.1} parent=5 // pred_check_branch
        %251 = sbr.rel (%p248) target = $region12
      $region11: #{_lambda_.1} parent=5 // pred_region
        %s252 = ssub.s32 %s18, 1
        // Predicated region
        $region13: #{_lambda_.1} parent=11 // pred_check
          %p253 = pneg %p65
        $region14: #{_lambda_.1} parent=11 // pred_check_branch
          %255 = sbr.rel (%p253) target = $region16
        $region15: #{_lambda_.1} parent=11 // pred_region
          _
        $region16: #{_lambda_.1} parent=11 // pred_fallthru
          _
        // Predicated region
        $region17: #{_lambda_.1} parent=11 // pred_check
          %p256 = pneg %p86
        $region18: #{_lambda_.1} parent=11 // pred_check_branch
          %258 = sbr.rel (%p256) target = $region20
        $region19: #{_lambda_.1} parent=11 // pred_region
          %s260 = ssub.s32 4096, 4096
          %261 = vsyncadd [#allocation3], %s260
          %s262 = sshll.u32 [#allocation2], 4
          %s263 = int_to_ptr.vmem [resolvable:$true] %s262
          %268 = dma.hbm_to_vmem [thread:$0]  %s2, 4096, %s263, [#allocation3], 256, 256, 16
        $region20: #{_lambda_.1} parent=11 // pred_fallthru
          _
        // Predicated region
        $region21: #{_lambda_.1} parent=11 // pred_check
          %p269 = pneg %p107
        $region22: #{_lambda_.1} parent=11 // pred_check_branch
          %271 = sbr.rel (%p269) target = $region24
        $region23: #{_lambda_.1} parent=11 // pred_region
          %s273 = ssub.s32 4096, 4096
          %274 = vsyncadd [#allocation5], %s273
          %s275 = sshll.u32 [#allocation4], 4
          %s276 = int_to_ptr.vmem [resolvable:$true] %s275
          %281 = dma.hbm_to_vmem [thread:$0]  %s3, 4096, %s276, [#allocation5], 256, 256, 16
        $region24: #{_lambda_.1} parent=11 // pred_fallthru
          _
        // Predicated region
        $region25: #{_lambda_.1} parent=11 // pred_check
          %p282 = pneg %p128
        $region26: #{_lambda_.1} parent=11 // pred_check_branch
          %284 = sbr.rel (%p282) target = $region28
        $region27: #{_lambda_.1} parent=11 // pred_region
          _
        $region28: #{_lambda_.1} parent=11 // pred_fallthru
          _
        // Predicated region
        $region29: #{_lambda_.1} parent=11 // pred_check
          %p285 = pneg %p149
        $region30: #{_lambda_.1} parent=11 // pred_check_branch
          %287 = sbr.rel (%p285) target = $region32
        $region31: #{_lambda_.1} parent=11 // pred_region
          _
        $region32: #{_lambda_.1} parent=11 // pred_fallthru
          _
        // Predicated region
        $region33: #{_lambda_.1} parent=11 // pred_check
          %p288 = pneg %p170
        $region34: #{_lambda_.1} parent=11 // pred_check_branch
          %290 = sbr.rel (%p288) target = $region36
        $region35: #{_lambda_.1} parent=11 // pred_region
          %s292 = ssub.s32 2048, 2048
          %293 = vsyncadd [#allocation5], %s292
          %s294 = sshll.u32 [#allocation6], 4
          %s295 = int_to_ptr.vmem [resolvable:$true] %s294
          %300 = dma.hbm_to_vmem [thread:$0]  %s6, 2048, %s295, [#allocation5], 128, 128, 8
        $region36: #{_lambda_.1} parent=11 // pred_fallthru
          _
        // Predicated region
        $region37: #{_lambda_.1} parent=11 // pred_check
          %p301 = pneg %p191
        $region38: #{_lambda_.1} parent=11 // pred_check_branch
          %303 = sbr.rel (%p301) target = $region40
        $region39: #{_lambda_.1} parent=11 // pred_region
          _
        $region40: #{_lambda_.1} parent=11 // pred_fallthru
          _
      $region12: #{_lambda_.1} parent=5 // pred_fallthru
        _
      %p304 = scmp.lt.s32.totalorder %s18, 8
      // Predicated region
      $region41: #{_lambda_.1} parent=5 // pred_check
        %p305 = pneg %p304
      $region42: #{_lambda_.1} parent=5 // pred_check_branch
        %307 = sbr.rel (%p305) target = $region44
      $region43: #{_lambda_.1} parent=5 // pred_region
        // Predicated region
        $region45: #{_lambda_.1} parent=43 // pred_check
          %p308 = pneg %p38
        $region46: #{_lambda_.1} parent=43 // pred_check_branch
          %310 = sbr.rel (%p308) target = $region48
        $region47: #{_lambda_.1} parent=43 // pred_region
          %p311 = scmp.lt.s32.totalorder %s18, 7
          %s312 = scalar_select %p311, %s18, 7
          %s313 = smul.addr %s312, 8
          %s314 = scalar_lea.vmem %s0, %s313
        $region48: #{_lambda_.1} parent=43 // pred_fallthru
          _
      $region44: #{_lambda_.1} parent=5 // pred_fallthru
        _
      %p315 = scmp.le.s32.totalorder 1, %s18
      %p316 = scmp.lt.s32.totalorder %s18, 9
      %p317 = pnand %p315, %p316
      %p318 = pneg %p317
      // Predicated region
      $region49: #{_lambda_.1} parent=5 // pred_check
        _
      $region50: #{_lambda_.1} parent=5 // pred_check_branch
        %320 = sbr.rel (%p317) target = $region52
      $region51: #{_lambda_.1} parent=5 // pred_region
        %s321 = ssub.s32 %s18, 1
        // Predicated region
        $region53: #{_lambda_.1} parent=51 // pred_check
          %p322 = pneg %p86
        $region54: #{_lambda_.1} parent=51 // pred_check_branch
          %324 = sbr.rel (%p322) target = $region56
        $region55: #{_lambda_.1} parent=51 // pred_region
          %325 = dma.done [#allocation3], 4096
        $region56: #{_lambda_.1} parent=51 // pred_fallthru
          _
        // Predicated region
        $region57: #{_lambda_.1} parent=51 // pred_check
          %p326 = pneg %p107
        $region58: #{_lambda_.1} parent=51 // pred_check_branch
          %328 = sbr.rel (%p326) target = $region60
        $region59: #{_lambda_.1} parent=51 // pred_region
          %329 = dma.done [#allocation5], 4096
        $region60: #{_lambda_.1} parent=51 // pred_fallthru
          _
        // Predicated region
        $region61: #{_lambda_.1} parent=51 // pred_check
          %p330 = pneg %p170
        $region62: #{_lambda_.1} parent=51 // pred_check_branch
          %332 = sbr.rel (%p330) target = $region64
        $region63: #{_lambda_.1} parent=51 // pred_region
          %333 = dma.done [#allocation5], 2048
        $region64: #{_lambda_.1} parent=51 // pred_fallthru
          _
        %p334 = scmp.lt.s32.totalorder %s23, 7
        %s335 = scalar_select %p334, %s23, 7
        %s336 = smul.addr %s335, 8
        %s337 = scalar_lea.vmem %s0, %s336
        %p338 = pneg %p44
        %p339 = pneg %p41
        %p340 = pneg %p65
        %p341 = pneg %p62
        %p342 = pneg %p86
        %p343 = pneg %p83
        %p344 = pneg %p107
        %p345 = pneg %p104
        %p346 = pneg %p128
        %p347 = pneg %p125
        %p348 = pneg %p149
        %p349 = pneg %p146
        %p350 = pneg %p170
        %p351 = pneg %p167
        %p352 = pneg %p191
        %p353 = pneg %p188
        %p354 = pneg %p217
        %p355 = pneg %p214
        %p356 = scmp.lt.s32.totalorder %s23, 7
        %s357 = scalar_select %p356, %s23, 7
        %s358 = smul.addr %s357, 8
        %s359 = scalar_lea.vmem %s8, %s358
        %p360 = pneg %p238
        %p361 = pneg %p235
        %p362 = scmp.lt.s32.totalorder %s23, 7
        %s363 = scalar_select %p362, %s23, 7
        %s364 = smul.addr %s363, 8
        %s365 = scalar_lea.vmem %s0, %s364
        %p366 = scmp.lt.s32.totalorder %s23, 7
        %s367 = scalar_select %p366, %s23, 7
        %s368 = smul.addr %s367, 8
        %s369 = scalar_lea.vmem %s8, %s368
        %p370 = scmp.eq.s32.totalorder %s23, 0
        // Predicated region
        $region65: #{_lambda_.1} parent=51 // pred_check
          %p371 = pneg %p370
        $region66: #{_lambda_.1} parent=51 // pred_check_branch
          %373 = sbr.rel (%p371) target = $region68
        $region67: #{_lambda_.1} parent=51 // pred_region
          %v374 = vld [vmem:[%s1] sm:$0xff]
          %375 = vst [vmem:[%s9] sm:$0xff] %v374
        $region68: #{_lambda_.1} parent=51 // pred_fallthru
          _
        %v376 = vld [vmem:[%s9] sm:$0xff]
        %v377 = vld [vmem:[%s365] sm:$0xff]
        %v378 = vld [vmem:[#allocation2] sm:$0xff]
        %v379 = vld [vmem:[#allocation2 + $0x8] sm:$0xff]
        %v380 = vld [vmem:[#allocation2 + $0x10] sm:$0xff]
        %v381 = vld [vmem:[#allocation2 + $0x18] sm:$0xff]
        %v382 = vld [vmem:[#allocation2 + $0x20] sm:$0xff]
        %v383 = vld [vmem:[#allocation2 + $0x28] sm:$0xff]
        %v384 = vld [vmem:[#allocation2 + $0x30] sm:$0xff]
        %v385 = vld [vmem:[#allocation2 + $0x38] sm:$0xff]
        %v386 = vld [vmem:[#allocation2 + $0x40] sm:$0xff]
        %v387 = vld [vmem:[#allocation2 + $0x48] sm:$0xff]
        %v388 = vld [vmem:[#allocation2 + $0x50] sm:$0xff]
        %v389 = vld [vmem:[#allocation2 + $0x58] sm:$0xff]
        %v390 = vld [vmem:[#allocation2 + $0x60] sm:$0xff]
        %v391 = vld [vmem:[#allocation2 + $0x68] sm:$0xff]
        %v392 = vld [vmem:[#allocation2 + $0x70] sm:$0xff]
        %v393 = vld [vmem:[#allocation2 + $0x78] sm:$0xff]
        %v394 = vld [vmem:[#allocation2 + $0x80] sm:$0xff]
        %v395 = vld [vmem:[#allocation2 + $0x88] sm:$0xff]
        %v396 = vld [vmem:[#allocation2 + $0x90] sm:$0xff]
        %v397 = vld [vmem:[#allocation2 + $0x98] sm:$0xff]
        %v398 = vld [vmem:[#allocation2 + $0xa0] sm:$0xff]
        %v399 = vld [vmem:[#allocation2 + $0xa8] sm:$0xff]
        %v400 = vld [vmem:[#allocation2 + $0xb0] sm:$0xff]
        %v401 = vld [vmem:[#allocation2 + $0xb8] sm:$0xff]
        %v402 = vld [vmem:[#allocation2 + $0xc0] sm:$0xff]
        %v403 = vld [vmem:[#allocation2 + $0xc8] sm:$0xff]
        %v404 = vld [vmem:[#allocation2 + $0xd0] sm:$0xff]
        %v405 = vld [vmem:[#allocation2 + $0xd8] sm:$0xff]
        %v406 = vld [vmem:[#allocation2 + $0xe0] sm:$0xff]
        %v407 = vld [vmem:[#allocation2 + $0xe8] sm:$0xff]
        %v408 = vld [vmem:[#allocation2 + $0xf0] sm:$0xff]
        %v409 = vld [vmem:[#allocation2 + $0xf8] sm:$0xff]
        %v410 = vld [vmem:[#allocation4] sm:$0xff]
        %v411 = vld [vmem:[#allocation4 + $0x8] sm:$0xff]
        %v412 = vld [vmem:[#allocation4 + $0x10] sm:$0xff]
        %v413 = vld [vmem:[#allocation4 + $0x18] sm:$0xff]
        %v414 = vld [vmem:[#allocation4 + $0x20] sm:$0xff]
        %v415 = vld [vmem:[#allocation4 + $0x28] sm:$0xff]
        %v416 = vld [vmem:[#allocation4 + $0x30] sm:$0xff]
        %v417 = vld [vmem:[#allocation4 + $0x38] sm:$0xff]
        %v418 = vld [vmem:[#allocation4 + $0x40] sm:$0xff]
        %v419 = vld [vmem:[#allocation4 + $0x48] sm:$0xff]
        %v420 = vld [vmem:[#allocation4 + $0x50] sm:$0xff]
        %v421 = vld [vmem:[#allocation4 + $0x58] sm:$0xff]
        %v422 = vld [vmem:[#allocation4 + $0x60] sm:$0xff]
        %v423 = vld [vmem:[#allocation4 + $0x68] sm:$0xff]
        %v424 = vld [vmem:[#allocation4 + $0x70] sm:$0xff]
        %v425 = vld [vmem:[#allocation4 + $0x78] sm:$0xff]
        %v426 = vld [vmem:[#allocation4 + $0x80] sm:$0xff]
        %v427 = vld [vmem:[#allocation4 + $0x88] sm:$0xff]
        %v428 = vld [vmem:[#allocation4 + $0x90] sm:$0xff]
        %v429 = vld [vmem:[#allocation4 + $0x98] sm:$0xff]
        %v430 = vld [vmem:[#allocation4 + $0xa0] sm:$0xff]
        %v431 = vld [vmem:[#allocation4 + $0xa8] sm:$0xff]
        %v432 = vld [vmem:[#allocation4 + $0xb0] sm:$0xff]
        %v433 = vld [vmem:[#allocation4 + $0xb8] sm:$0xff]
        %v434 = vld [vmem:[#allocation4 + $0xc0] sm:$0xff]
        %v435 = vld [vmem:[#allocation4 + $0xc8] sm:$0xff]
        %v436 = vld [vmem:[#allocation4 + $0xd0] sm:$0xff]
        %v437 = vld [vmem:[#allocation4 + $0xd8] sm:$0xff]
        %v438 = vld [vmem:[#allocation4 + $0xe0] sm:$0xff]
        %v439 = vld [vmem:[#allocation4 + $0xe8] sm:$0xff]
        %v440 = vld [vmem:[#allocation4 + $0xf0] sm:$0xff]
        %v441 = vld [vmem:[#allocation4 + $0xf8] sm:$0xff]
        %442 = vmatprep.subr.mxu0 %v441
        %443 = vmatpush1.msra.mxu0 %v440
        %444 = vmatprep.subr.mxu0 %v439
        %445 = vmatpush1.msra.mxu0 %v438
        %446 = vmatprep.subr.mxu0 %v437
        %447 = vmatpush1.msra.mxu0 %v436
        %448 = vmatprep.subr.mxu0 %v435
        %449 = vmatpush1.msra.mxu0 %v434
        %450 = vmatprep.subr.mxu0 %v433
        %451 = vmatpush1.msra.mxu0 %v432
        %452 = vmatprep.subr.mxu0 %v431
        %453 = vmatpush1.msra.mxu0 %v430
        %454 = vmatprep.subr.mxu0 %v429
        %455 = vmatpush1.msra.mxu0 %v428
        %456 = vmatprep.subr.mxu0 %v427
        %457 = vmatpush1.msra.mxu0 %v426
        %458 = vmatprep.subr.mxu0 %v425
        %459 = vmatpush1.msra.mxu0 %v424
        %460 = vmatprep.subr.mxu0 %v423
        %461 = vmatpush1.msra.mxu0 %v422
        %462 = vmatprep.subr.mxu0 %v421
        %463 = vmatpush1.msra.mxu0 %v420
        %464 = vmatprep.subr.mxu0 %v419
        %465 = vmatpush1.msra.mxu0 %v418
        %466 = vmatprep.subr.mxu0 %v417
        %467 = vmatpush1.msra.mxu0 %v416
        %468 = vmatprep.subr.mxu0 %v415
        %469 = vmatpush1.msra.mxu0 %v414
        %470 = vmatprep.subr.mxu0 %v413
        %471 = vmatpush1.msra.mxu0 %v412
        %472 = vmatprep.subr.mxu0 %v411
        %473 = vmatpush1.msra.mxu0 %v410
        %474 = vmatprep.subr.mxu0 0.0
        %475 = vmatpush2.msra.mxu0 0.0
        %476 = vmatprep.subr.mxu0 0.0
        %477 = vmatpush2.msra.mxu0 0.0
        %478 = vmatprep.subr.mxu0 0.0
        %479 = vmatpush2.msra.mxu0 0.0
        %480 = vmatprep.subr.mxu0 0.0
        %481 = vmatpush2.msra.mxu0 0.0
        %482 = vmatprep.subr.mxu0 0.0
        %483 = vmatpush2.msra.mxu0 0.0
        %484 = vmatprep.subr.mxu0 0.0
        %485 = vmatpush2.msra.mxu0 0.0
        %486 = vmatprep.subr.mxu0 0.0
        %487 = vmatpush2.msra.mxu0 0.0
        %488 = vmatprep.subr.mxu0 0.0
        %489 = vmatpush2.msra.mxu0 0.0
        %490 = vmatprep.subr.mxu0 0.0
        %491 = vmatpush2.msra.mxu0 0.0
        %492 = vmatprep.subr.mxu0 0.0
        %493 = vmatpush2.msra.mxu0 0.0
        %494 = vmatprep.subr.mxu0 0.0
        %495 = vmatpush2.msra.mxu0 0.0
        %496 = vmatprep.subr.mxu0 0.0
        %497 = vmatpush2.msra.mxu0 0.0
        %498 = vmatprep.subr.mxu0 0.0
        %499 = vmatpush2.msra.mxu0 0.0
        %500 = vmatprep.subr.mxu0 0.0
        %501 = vmatpush2.msra.mxu0 0.0
        %502 = vmatprep.subr.mxu0 0.0
        %503 = vmatpush2.msra.mxu0 0.0
        %504 = vmatprep.subr.mxu0 0.0
        %505 = vmatpush2.msra.mxu0 0.0
        %506 = vmatprep.mubr.f32.mxu0 0.0
        %507 = vmatmul.mubr.f32.gmra.mxu0 %v376
        %v508 = vpop.f32.mrf.mxu0
        %v509 = vadd.f32 0.0, %v508
        %v510 = vpop.f32.mrf.mxu0
        %v511 = vadd.f32 0.0, %v510
        %512 = vdwg.mxu0
        %513 = vmatprep.subr.mxu0 %v409
        %514 = vmatpush1.msra.mxu0 %v408
        %515 = vmatprep.subr.mxu0 %v407
        %516 = vmatpush1.msra.mxu0 %v406
        %517 = vmatprep.subr.mxu0 %v405
        %518 = vmatpush1.msra.mxu0 %v404
        %519 = vmatprep.subr.mxu0 %v403
        %520 = vmatpush1.msra.mxu0 %v402
        %521 = vmatprep.subr.mxu0 %v401
        %522 = vmatpush1.msra.mxu0 %v400
        %523 = vmatprep.subr.mxu0 %v399
        %524 = vmatpush1.msra.mxu0 %v398
        %525 = vmatprep.subr.mxu0 %v397
        %526 = vmatpush1.msra.mxu0 %v396
        %527 = vmatprep.subr.mxu0 %v395
        %528 = vmatpush1.msra.mxu0 %v394
        %529 = vmatprep.subr.mxu0 %v393
        %530 = vmatpush1.msra.mxu0 %v392
        %531 = vmatprep.subr.mxu0 %v391
        %532 = vmatpush1.msra.mxu0 %v390
        %533 = vmatprep.subr.mxu0 %v389
        %534 = vmatpush1.msra.mxu0 %v388
        %535 = vmatprep.subr.mxu0 %v387
        %536 = vmatpush1.msra.mxu0 %v386
        %537 = vmatprep.subr.mxu0 %v385
        %538 = vmatpush1.msra.mxu0 %v384
        %539 = vmatprep.subr.mxu0 %v383
        %540 = vmatpush1.msra.mxu0 %v382
        %541 = vmatprep.subr.mxu0 %v381
        %542 = vmatpush1.msra.mxu0 %v380
        %543 = vmatprep.subr.mxu0 %v379
        %544 = vmatpush1.msra.mxu0 %v378
        %545 = vmatprep.subr.mxu0 0.0
        %546 = vmatpush2.msra.mxu0 0.0
        %547 = vmatprep.subr.mxu0 0.0
        %548 = vmatpush2.msra.mxu0 0.0
        %549 = vmatprep.subr.mxu0 0.0
        %550 = vmatpush2.msra.mxu0 0.0
        %551 = vmatprep.subr.mxu0 0.0
        %552 = vmatpush2.msra.mxu0 0.0
        %553 = vmatprep.subr.mxu0 0.0
        %554 = vmatpush2.msra.mxu0 0.0
        %555 = vmatprep.subr.mxu0 0.0
        %556 = vmatpush2.msra.mxu0 0.0
        %557 = vmatprep.subr.mxu0 0.0
        %558 = vmatpush2.msra.mxu0 0.0
        %559 = vmatprep.subr.mxu0 0.0
        %560 = vmatpush2.msra.mxu0 0.0
        %561 = vmatprep.subr.mxu0 0.0
        %562 = vmatpush2.msra.mxu0 0.0
        %563 = vmatprep.subr.mxu0 0.0
        %564 = vmatpush2.msra.mxu0 0.0
        %565 = vmatprep.subr.mxu0 0.0
        %566 = vmatpush2.msra.mxu0 0.0
        %567 = vmatprep.subr.mxu0 0.0
        %568 = vmatpush2.msra.mxu0 0.0
        %569 = vmatprep.subr.mxu0 0.0
        %570 = vmatpush2.msra.mxu0 0.0
        %571 = vmatprep.subr.mxu0 0.0
        %572 = vmatpush2.msra.mxu0 0.0
        %573 = vmatprep.subr.mxu0 0.0
        %574 = vmatpush2.msra.mxu0 0.0
        %575 = vmatprep.subr.mxu0 0.0
        %576 = vmatpush2.msra.mxu0 0.0
        %577 = vmatprep.mubr.f32.mxu0 0.0
        %578 = vmatmul.mubr.f32.gmra.mxu0 %v377
        %v579 = vpop.f32.mrf.mxu0
        %v580 = vadd.f32 %v509, %v579
        %v581 = vpop.f32.mrf.mxu0
        %v582 = vadd.f32 %v511, %v581
        %583 = vdwg.mxu0
        %v584 = vld [vmem:[%s4] sm:$0x3]
        %v586 = vlaneseq
        %v587 = vshrl.u32 %v586, 7
        %v588 = vsub.s32 0, %v587
        %v589 = vrot.slane %v584, %v588
        %v590 = vlaneseq
        %v591 = vshrl.u32 %v590, 7
        %v592 = vsub.s32 1, %v591
        %v593 = vrot.slane %v584, %v592
        %v596 = vadd.f32 %v580, %v589
        %v597 = vadd.f32 %v582, %v593
        %v598 = vld [vmem:[%s5] sm:$0xff]
        %v599 = vld [vmem:[%s5 + $0x8] sm:$0xff]
        %v600 = vld [vmem:[%s5 + $0x10] sm:$0xff]
        %v601 = vld [vmem:[%s5 + $0x18] sm:$0xff]
        %v602 = vld [vmem:[%s5 + $0x20] sm:$0xff]
        %v603 = vld [vmem:[%s5 + $0x28] sm:$0xff]
        %v604 = vld [vmem:[%s5 + $0x30] sm:$0xff]
        %v605 = vld [vmem:[%s5 + $0x38] sm:$0xff]
        %v606 = vld [vmem:[%s5 + $0x40] sm:$0xff]
        %v607 = vld [vmem:[%s5 + $0x48] sm:$0xff]
        %v608 = vld [vmem:[%s5 + $0x50] sm:$0xff]
        %v609 = vld [vmem:[%s5 + $0x58] sm:$0xff]
        %v610 = vld [vmem:[%s5 + $0x60] sm:$0xff]
        %v611 = vld [vmem:[%s5 + $0x68] sm:$0xff]
        %v612 = vld [vmem:[%s5 + $0x70] sm:$0xff]
        %v613 = vld [vmem:[%s5 + $0x78] sm:$0xff]
        %v614 = vld [vmem:[#allocation6] sm:$0xff]
        %v615 = vld [vmem:[#allocation6 + $0x8] sm:$0xff]
        %v616 = vld [vmem:[#allocation6 + $0x10] sm:$0xff]
        %v617 = vld [vmem:[#allocation6 + $0x18] sm:$0xff]
        %v618 = vld [vmem:[#allocation6 + $0x20] sm:$0xff]
        %v619 = vld [vmem:[#allocation6 + $0x28] sm:$0xff]
        %v620 = vld [vmem:[#allocation6 + $0x30] sm:$0xff]
        %v621 = vld [vmem:[#allocation6 + $0x38] sm:$0xff]
        %v622 = vld [vmem:[#allocation6 + $0x40] sm:$0xff]
        %v623 = vld [vmem:[#allocation6 + $0x48] sm:$0xff]
        %v624 = vld [vmem:[#allocation6 + $0x50] sm:$0xff]
        %v625 = vld [vmem:[#allocation6 + $0x58] sm:$0xff]
        %v626 = vld [vmem:[#allocation6 + $0x60] sm:$0xff]
        %v627 = vld [vmem:[#allocation6 + $0x68] sm:$0xff]
        %v628 = vld [vmem:[#allocation6 + $0x70] sm:$0xff]
        %v629 = vld [vmem:[#allocation6 + $0x78] sm:$0xff]
        %630 = vmatprep.subr.mxu0 0.0
        %631 = vmatpush1.msra.mxu0 %v629
        %632 = vmatprep.subr.mxu0 0.0
        %633 = vmatpush1.msra.mxu0 %v628
        %634 = vmatprep.subr.mxu0 0.0
        %635 = vmatpush1.msra.mxu0 %v627
        %636 = vmatprep.subr.mxu0 0.0
        %637 = vmatpush1.msra.mxu0 %v626
        %638 = vmatprep.subr.mxu0 0.0
        %639 = vmatpush1.msra.mxu0 %v625
        %640 = vmatprep.subr.mxu0 0.0
        %641 = vmatpush1.msra.mxu0 %v624
        %642 = vmatprep.subr.mxu0 0.0
        %643 = vmatpush1.msra.mxu0 %v623
        %644 = vmatprep.subr.mxu0 0.0
        %645 = vmatpush1.msra.mxu0 %v622
        %646 = vmatprep.subr.mxu0 0.0
        %647 = vmatpush1.msra.mxu0 %v621
        %648 = vmatprep.subr.mxu0 0.0
        %649 = vmatpush1.msra.mxu0 %v620
        %650 = vmatprep.subr.mxu0 0.0
        %651 = vmatpush1.msra.mxu0 %v619
        %652 = vmatprep.subr.mxu0 0.0
        %653 = vmatpush1.msra.mxu0 %v618
        %654 = vmatprep.subr.mxu0 0.0
        %655 = vmatpush1.msra.mxu0 %v617
        %656 = vmatprep.subr.mxu0 0.0
        %657 = vmatpush1.msra.mxu0 %v616
        %658 = vmatprep.subr.mxu0 0.0
        %659 = vmatpush1.msra.mxu0 %v615
        %660 = vmatprep.subr.mxu0 0.0
        %661 = vmatpush1.msra.mxu0 %v614
        %662 = vmatprep.subr.mxu0 0.0
        %663 = vmatpush2.msra.mxu0 0.0
        %664 = vmatprep.subr.mxu0 0.0
        %665 = vmatpush2.msra.mxu0 0.0
        %666 = vmatprep.subr.mxu0 0.0
        %667 = vmatpush2.msra.mxu0 0.0
        %668 = vmatprep.subr.mxu0 0.0
        %669 = vmatpush2.msra.mxu0 0.0
        %670 = vmatprep.subr.mxu0 0.0
        %671 = vmatpush2.msra.mxu0 0.0
        %672 = vmatprep.subr.mxu0 0.0
        %673 = vmatpush2.msra.mxu0 0.0
        %674 = vmatprep.subr.mxu0 0.0
        %675 = vmatpush2.msra.mxu0 0.0
        %676 = vmatprep.subr.mxu0 0.0
        %677 = vmatpush2.msra.mxu0 0.0
        %678 = vmatprep.subr.mxu0 0.0
        %679 = vmatpush2.msra.mxu0 0.0
        %680 = vmatprep.subr.mxu0 0.0
        %681 = vmatpush2.msra.mxu0 0.0
        %682 = vmatprep.subr.mxu0 0.0
        %683 = vmatpush2.msra.mxu0 0.0
        %684 = vmatprep.subr.mxu0 0.0
        %685 = vmatpush2.msra.mxu0 0.0
        %686 = vmatprep.subr.mxu0 0.0
        %687 = vmatpush2.msra.mxu0 0.0
        %688 = vmatprep.subr.mxu0 0.0
        %689 = vmatpush2.msra.mxu0 0.0
        %690 = vmatprep.subr.mxu0 0.0
        %691 = vmatpush2.msra.mxu0 0.0
        %692 = vmatprep.subr.mxu0 0.0
        %693 = vmatpush2.msra.mxu0 0.0
        %694 = vmatprep.mubr.f32.mxu0 0.0
        %695 = vmatmul.mubr.f32.gmra.mxu0 %v597
        %v696 = vpop.f32.mrf.mxu0
        %v697 = vadd.f32 0.0, %v696
        %v698 = vpop.f32.mrf.mxu0
        %699 = vdwg.mxu0
        %700 = vmatprep.subr.mxu0 0.0
        %701 = vmatpush1.msra.mxu0 %v613
        %702 = vmatprep.subr.mxu0 0.0
        %703 = vmatpush1.msra.mxu0 %v612
        %704 = vmatprep.subr.mxu0 0.0
        %705 = vmatpush1.msra.mxu0 %v611
        %706 = vmatprep.subr.mxu0 0.0
        %707 = vmatpush1.msra.mxu0 %v610
        %708 = vmatprep.subr.mxu0 0.0
        %709 = vmatpush1.msra.mxu0 %v609
        %710 = vmatprep.subr.mxu0 0.0
        %711 = vmatpush1.msra.mxu0 %v608
        %712 = vmatprep.subr.mxu0 0.0
        %713 = vmatpush1.msra.mxu0 %v607
        %714 = vmatprep.subr.mxu0 0.0
        %715 = vmatpush1.msra.mxu0 %v606
        %716 = vmatprep.subr.mxu0 0.0
        %717 = vmatpush1.msra.mxu0 %v605
        %718 = vmatprep.subr.mxu0 0.0
        %719 = vmatpush1.msra.mxu0 %v604
        %720 = vmatprep.subr.mxu0 0.0
        %721 = vmatpush1.msra.mxu0 %v603
        %722 = vmatprep.subr.mxu0 0.0
        %723 = vmatpush1.msra.mxu0 %v602
        %724 = vmatprep.subr.mxu0 0.0
        %725 = vmatpush1.msra.mxu0 %v601
        %726 = vmatprep.subr.mxu0 0.0
        %727 = vmatpush1.msra.mxu0 %v600
        %728 = vmatprep.subr.mxu0 0.0
        %729 = vmatpush1.msra.mxu0 %v599
        %730 = vmatprep.subr.mxu0 0.0
        %731 = vmatpush1.msra.mxu0 %v598
        %732 = vmatprep.subr.mxu0 0.0
        %733 = vmatpush2.msra.mxu0 0.0
        %734 = vmatprep.subr.mxu0 0.0
        %735 = vmatpush2.msra.mxu0 0.0
        %736 = vmatprep.subr.mxu0 0.0
        %737 = vmatpush2.msra.mxu0 0.0
        %738 = vmatprep.subr.mxu0 0.0
        %739 = vmatpush2.msra.mxu0 0.0
        %740 = vmatprep.subr.mxu0 0.0
        %741 = vmatpush2.msra.mxu0 0.0
        %742 = vmatprep.subr.mxu0 0.0
        %743 = vmatpush2.msra.mxu0 0.0
        %744 = vmatprep.subr.mxu0 0.0
        %745 = vmatpush2.msra.mxu0 0.0
        %746 = vmatprep.subr.mxu0 0.0
        %747 = vmatpush2.msra.mxu0 0.0
        %748 = vmatprep.subr.mxu0 0.0
        %749 = vmatpush2.msra.mxu0 0.0
        %750 = vmatprep.subr.mxu0 0.0
        %751 = vmatpush2.msra.mxu0 0.0
        %752 = vmatprep.subr.mxu0 0.0
        %753 = vmatpush2.msra.mxu0 0.0
        %754 = vmatprep.subr.mxu0 0.0
        %755 = vmatpush2.msra.mxu0 0.0
        %756 = vmatprep.subr.mxu0 0.0
        %757 = vmatpush2.msra.mxu0 0.0
        %758 = vmatprep.subr.mxu0 0.0
        %759 = vmatpush2.msra.mxu0 0.0
        %760 = vmatprep.subr.mxu0 0.0
        %761 = vmatpush2.msra.mxu0 0.0
        %762 = vmatprep.subr.mxu0 0.0
        %763 = vmatpush2.msra.mxu0 0.0
        %764 = vmatprep.mubr.f32.mxu0 0.0
        %765 = vmatmul.mubr.f32.gmra.mxu0 %v596
        %v766 = vpop.f32.mrf.mxu0
        %v767 = vadd.f32 %v697, %v766
        %v768 = vpop.f32.mrf.mxu0
        %769 = vdwg.mxu0
        %v770 = vld [vmem:[%s7] sm:$0x1]
        %v772 = vlaneseq
        %v773 = vshrl.u32 %v772, 7
        %v774 = vsub.s32 0, %v773
        %v775 = vrot.slane %v770, %v774
        %v777 = vadd.f32 %v767, %v775
        %v778 = vlaneseq
        %v779 = vand.u32 %v778, 127
        %vm780 = vcmp.lt.s32.totalorder %v779, 16
        %v781 = vsel %vm780, %v777, -1e+30
        %782 = vmax.xlane.f32.xlu0 %v781
        %v783 = vpop.xlane.xlu0 %782
        %v784 = vsub.f32 %v781, %v783
        %v785 = vmul.f32 %v784, 1.442695
        %v786 = vpow.pop %v785
        %787 = vadd.xlane.f32.xlu0 %v786
        %v788 = vpop.xlane.xlu0 %787
        %v789 = vlog2.pop %v788
        %v790 = vmul.f32 %v789, 0.6931472
        %v791 = vsub.f32 %v784, %v790
        %792 = vst [vmem:[%s369] sm:$0xff] %v791
        %793 = vst [vmem:[%s9] sm:$0xff] %v596
        %p794 = scmp.lt.s32.totalorder %s23, 7
        %s795 = scalar_select %p794, %s23, 7
        %s796 = smul.addr %s795, 8
        %s797 = scalar_lea.vmem %s8, %s796
        // Predicated region
        $region69: #{_lambda_.1} parent=51 // pred_check
          %p798 = pneg %p214
        $region70: #{_lambda_.1} parent=51 // pred_check_branch
          %800 = sbr.rel (%p798) target = $region72
        $region71: #{_lambda_.1} parent=51 // pred_region
          _
        $region72: #{_lambda_.1} parent=51 // pred_fallthru
          _
        // Predicated region
        $region73: #{_lambda_.1} parent=51 // pred_check
          %p801 = pneg %p235
        $region74: #{_lambda_.1} parent=51 // pred_check_branch
          %803 = sbr.rel (%p801) target = $region76
        $region75: #{_lambda_.1} parent=51 // pred_region
          _
        $region76: #{_lambda_.1} parent=51 // pred_fallthru
          _
        // Predicated region
        $region77: #{_lambda_.1} parent=51 // pred_check
          %p804 = pneg %p235
        $region78: #{_lambda_.1} parent=51 // pred_check_branch
          %806 = sbr.rel (%p804) target = $region80
        $region79: #{_lambda_.1} parent=51 // pred_region
          _
        $region80: #{_lambda_.1} parent=51 // pred_fallthru
          _
      $region52: #{_lambda_.1} parent=5 // pred_fallthru
        _
      %p807 = scmp.le.s32.totalorder 2, %s18
      // Predicated region
      $region81: #{_lambda_.1} parent=5 // pred_check
        %p808 = pneg %p807
      $region82: #{_lambda_.1} parent=5 // pred_check_branch
        %810 = sbr.rel (%p808) target = $region84
      $region83: #{_lambda_.1} parent=5 // pred_region
        %s811 = ssub.s32 %s18, 2
        // Predicated region
        $region85: #{_lambda_.1} parent=83 // pred_check
          %p812 = pneg %p220
        $region86: #{_lambda_.1} parent=83 // pred_check_branch
          %814 = sbr.rel (%p812) target = $region88
        $region87: #{_lambda_.1} parent=83 // pred_region
          %p815 = scmp.lt.s32.totalorder %s24, 7
          %s816 = scalar_select %p815, %s24, 7
          %s817 = smul.addr %s816, 8
          %s818 = scalar_lea.vmem %s8, %s817
        $region88: #{_lambda_.1} parent=83 // pred_fallthru
          _
      $region84: #{_lambda_.1} parent=5 // pred_fallthru
        _
    $region6: #{_lambda_.1} parent=1 // loop_footer
      %s22 = sadd.s32 1, %s18
    $region7: #{_lambda_.1} parent=1 // loop_footer_branch
      %17 = sbr.rel target = $region3
    $region8: #{_lambda_.1} parent=1 // loop_exit
      _
    %819 = vsyncpa [#allocation3], 1
    %s820 = scalar_lea.sflag [#allocation3], 1
    %821 = vsyncpa %s820, 1
    %822 = vsyncpa [#allocation5], 1

</llo_original>
